<compile_context>
chip_gen: v5e
topology: v5e:2x2
jax: 0.10.0
libtpu: 0.0.40
codegen_flags: <defaults>
</compile_context>

<pallas_src>
from functools import partial

import jax
import jax.numpy as jnp
from jax import lax
from jax.experimental import pallas as pl
from jax.experimental.pallas import tpu as pltpu


def _ctc_decoder_kernel(x_ref, w_ref, b_ref, blank_ref, m_ref, o_ref):
    # x_ref:     (C, TW) f32   feature-major slab straight from NCHW x
    # w_ref:     (C, N)  bf16  transposed Linear weight (VMEM-resident)
    # b_ref:     (1, N)  f32   bias row (VMEM-resident)
    # blank_ref: (1, N)  f32   0.0 at blank_id, -inf elsewhere (VMEM-resident)
    # m_ref:     (1, TW) f32   mask, lane-major (1 = valid, 0 = padding)
    # o_ref:     (TW, N) f32   output tile (full class dim)
    y = lax.dot_general(
        x_ref[...].astype(jnp.bfloat16), w_ref[...],
        dimension_numbers=(((0,), (0,)), ((), ())),
        preferred_element_type=jnp.float32)          # (TW, N), MXU, f32 acc
    y = y + b_ref[...]

    # Padding rows: select the precomputed blank row.  `mask < 0.5` matches
    # round(1 - mask) != 0 for the {0.0, 1.0} masks the module uses.
    pad = jnp.transpose(m_ref[...]) < 0.5            # (TW, 1) bool, small XLU op
    o_ref[...] = jnp.where(pad, blank_ref[...], y)


def _round_up(n, m):
    return (n + m - 1) // m * m


@partial(jax.jit, static_argnames=("blank_id",))
def ctc_decoder_forward(x, mask, weight, bias, blank_id):
    """x: (B, C, 1, W) f32, mask: (B, 1, W) f32,
    weight: (N, C) (PyTorch Linear layout), bias: (N,). blank_id static."""
    B, C, H, W = x.shape
    assert H == 1, "For CTC, the height must be squeezed to 1!"
    N = weight.shape[0]

    mask_flat = mask.reshape(B, W)                          # char_masks
    x3 = x.reshape(B, C, W).astype(jnp.float32)             # squeeze H, no copy
    mask3 = mask_flat.reshape(B, 1, W).astype(jnp.float32)  # lane-major mask

    w_t = weight.T.astype(jnp.bfloat16)                     # (C, N)
    b_row = bias.astype(jnp.float32).reshape(1, N)
    blank_row = jnp.where(jnp.arange(N) == blank_id,
                          jnp.float32(0.0),
                          jnp.float32(-jnp.inf)).reshape(1, N)

    # ---- W handling --------------------------------------------------------
    # Long unaligned W: pad to a multiple of 128 so tiles stay bounded on every
    # generation (v7x VMEM is 64 MiB); short unaligned W: single full-W block.
    if W % 128 != 0 and W > 1024:
        W_work = _round_up(W, 128)
        x3 = jnp.pad(x3, ((0, 0), (0, 0), (0, W_work - W)))
        mask3 = jnp.pad(mask3, ((0, 0), (0, 0), (0, W_work - W)))
    else:
        W_work = W

    # ---- tile sizes --------------------------------------------------------
    n_lanes = _round_up(N, 128)          # VMEM lane-padded class width
    # resident operands (weight bf16 + bias + blank row), counted double-buffered
    resident = 2 * (C * n_lanes * 2 + 2 * 8 * n_lanes * 4)
    budget = 24 * 1024 * 1024            # double-buffered working-set target

    def _per_tile_bytes(t):
        # x tile (f32) + output tile (f32, lane-padded) + lane-major mask tile
        return C * t * 4 + t * n_lanes * 4 + 8 * t * 4

    if W_work % 128 == 0:
        cap = 2048
        while cap > 128 and resident + 2 * _per_tile_bytes(cap) > budget:
            cap //= 2
        if W_work <= cap:
            tw = W_work
        else:
            tw, t = 128, 128
            while t <= cap:              # largest 128-multiple divisor of W_work
                if W_work % t == 0:
                    tw = t
                t += 128
        # Megacore: make sure there are >= 2 program instances so both v7x TCs
        # get work.
        if B * (W_work // tw) < 2 and tw >= 256 and (tw // 2) % 128 == 0:
            tw //= 2
    else:
        tw = W_work                       # small unaligned W -> full-dim block

    grid = (B, W_work // tw)

    footprint = resident + 2 * _per_tile_bytes(tw)
    vmem_limit = int(min(48 * 1024 * 1024,
                         max(32 * 1024 * 1024, footprint + 8 * 1024 * 1024)))

    cost = pl.CostEstimate(
        flops=2 * B * W_work * C * N,
        transcendentals=0,
        bytes_accessed=(B * C * W_work * 4      # x read
                        + C * N * 2             # weight read
                        + 2 * N * 4             # bias + blank row
                        + B * W_work * 4        # mask read
                        + B * W_work * N * 4),  # logits write
    )

    out = pl.pallas_call(
        _ctc_decoder_kernel,
        out_shape=jax.ShapeDtypeStruct((B, W_work, N), jnp.float32),
        grid_spec=pltpu.PrefetchScalarGridSpec(
            num_scalar_prefetch=0,
            grid=grid,
            in_specs=[
                # x in native (B, C, W) layout -> (C, TW) tile per step.
                pl.BlockSpec((None, C, tw), lambda b, wi: (b, 0, wi)),
                # weight / bias / blank row: constant index_map -> VMEM-resident.
                pl.BlockSpec((C, N), lambda b, wi: (0, 0)),
                pl.BlockSpec((1, N), lambda b, wi: (0, 0)),
                pl.BlockSpec((1, N), lambda b, wi: (0, 0)),
                # lane-major mask tile for this W tile.
                pl.BlockSpec((None, 1, tw), lambda b, wi: (b, 0, wi)),
            ],
            out_specs=pl.BlockSpec((None, tw, N), lambda b, wi: (b, wi, 0)),
        ),
        compiler_params=pltpu.CompilerParams(
            dimension_semantics=("parallel", "parallel"),
            vmem_limit_bytes=vmem_limit,
        ),
        cost_estimate=cost,
    )(x3, w_t, b_row, blank_row, mask3)

    logits = out if W_work == W else out[:, :W, :]
    return dict(logits=logits, char_masks=mask_flat)


def _reference_forward(x, mask, weight, bias, blank_id):
    """Pure-JAX f32 reference mirroring the PyTorch module."""
    B, C, H, W = x.shape
    mask_flat = mask.reshape(B, -1)
    mask_pad = jnp.round(1.0 - mask_flat) != 0.0
    xs = jnp.transpose(x, (0, 2, 3, 1)).reshape(B, W, C)
    y = xs @ weight.T + bias
    pad = mask_pad[:, :, None]
    col = jnp.arange(y.shape[-1])[None, None, :]
    y = jnp.where(pad & (col != blank_id), -jnp.inf, y)
    y = jnp.where(pad & (col == blank_id), 0.0, y)
    return dict(logits=y, char_masks=mask_flat)


if __name__ == "__main__":
    key = jax.random.PRNGKey(0)
    B, C, W = 2, 128, 128          # feat_dim = 128, sequence length = 128
    num_classes = 32
    blank_id = 0

    k1, k2, k3 = jax.random.split(key, 3)
    x = jax.random.normal(k1, (B, C, 1, W), dtype=jnp.float32)
    # mask: valid prefix lengths 70 and 100 (rest is padding)
    lengths = jnp.array([70, 100])
    mask = (jnp.arange(W)[None, None, :] < lengths[:, None, None]
            ).astype(jnp.float32)                          # (B, 1, W)

    # Deterministic Linear params (PyTorch layout: weight (N, C), bias (N,))
    weight = jax.random.normal(k2, (num_classes, C), dtype=jnp.float32) * 0.05
    bias = jax.random.normal(k3, (num_classes,), dtype=jnp.float32) * 0.01

    out = ctc_decoder_forward(x, mask, weight, bias, blank_id)
    jax.block_until_ready(out["logits"])

    ref = _reference_forward(x, mask, weight, bias, blank_id)
    assert out["logits"].shape == (B, W, num_classes)
    assert out["char_masks"].shape == (B, W)

    got, want = out["logits"], ref["logits"]
    # -inf / 0.0 padding pattern must match exactly.
    same_inf = jnp.all(jnp.isinf(got) == jnp.isinf(want))
    finite = jnp.isfinite(want)
    # Tolerance accounts for bf16 matmul operands (f32 accumulation).
    close = jnp.allclose(jnp.where(finite, got, 0.0),
                         jnp.where(finite, want, 0.0), atol=2e-2, rtol=2e-2)
    assert bool(same_inf) and bool(close), "Mismatch vs reference"
    assert bool(jnp.allclose(out["char_masks"], ref["char_masks"]))

    print("KERNEL_OK")
</pallas_src>

<mosaic_0001>
module attributes {stable_mosaic.version = 11 : i64} {
  func.func @_ctc_decoder_kernel(%arg0: i32, %arg1: i32, %arg2: memref<1x128x128xf32, #tpu.memory_space<vmem>>, %arg3: memref<128x32xbf16, #tpu.memory_space<vmem>>, %arg4: memref<1x32xf32, #tpu.memory_space<vmem>>, %arg5: memref<1x32xf32, #tpu.memory_space<vmem>>, %arg6: memref<1x1x128xf32, #tpu.memory_space<vmem>>, %arg7: memref<1x128x32xf32, #tpu.memory_space<vmem>>) attributes {dimension_semantics = [#tpu.dimension_semantics<parallel>, #tpu.dimension_semantics<parallel>], iteration_bounds = array<i64: 2, 1>, scalar_prefetch = 0 : i64, scratch_operands = 0 : i64, tpu.core_type = #tpu.core_type<tc>, window_params = [{transform_indices = @transform_0, window_bounds = array<i64: 1, 128, 128>}, {pipeline_mode = #tpu.pipeline_mode<synchronous>, transform_indices = @transform_1, window_bounds = array<i64: 128, 32>}, {pipeline_mode = #tpu.pipeline_mode<synchronous>, transform_indices = @transform_2, window_bounds = array<i64: 1, 32>}, {pipeline_mode = #tpu.pipeline_mode<synchronous>, transform_indices = @transform_3, window_bounds = array<i64: 1, 32>}, {transform_indices = @transform_4, window_bounds = array<i64: 1, 1, 128>}, {transform_indices = @transform_5, window_bounds = array<i64: 1, 128, 32>}]} {
    %c0 = arith.constant 0 : index
    %c0_0 = arith.constant 0 : index
    %c0_1 = arith.constant 0 : index
    %0 = vector.load %arg2[%c0, %c0_0, %c0_1] : memref<1x128x128xf32, #tpu.memory_space<vmem>>, vector<1x128x128xf32>
    %1 = vector.shape_cast %0 : vector<1x128x128xf32> to vector<128x128xf32>
    %2 = arith.truncf %1 : vector<128x128xf32> to vector<128x128xbf16>
    %c0_2 = arith.constant 0 : index
    %c0_3 = arith.constant 0 : index
    %3 = vector.load %arg3[%c0_2, %c0_3] : memref<128x32xbf16, #tpu.memory_space<vmem>>, vector<128x32xbf16>
    %cst = arith.constant dense<0.000000e+00> : vector<128x32xf32>
    %4 = tpu.matmul %2, %3, %cst {dimension_numbers = #tpu.dot_dimension_numbers<[0], [0], [1], [1], [0, 1, 1, 1], [], []>} : vector<128x128xbf16>, vector<128x32xbf16>, vector<128x32xf32> -> vector<128x32xf32>
    %c0_4 = arith.constant 0 : index
    %c0_5 = arith.constant 0 : index
    %5 = vector.load %arg4[%c0_4, %c0_5] : memref<1x32xf32, #tpu.memory_space<vmem>>, vector<1x32xf32>
    %6 = vector.broadcast %5 : vector<1x32xf32> to vector<128x32xf32>
    %7 = arith.addf %4, %6 : vector<128x32xf32>
    %c0_6 = arith.constant 0 : index
    %c0_7 = arith.constant 0 : index
    %c0_8 = arith.constant 0 : index
    %8 = vector.load %arg6[%c0_6, %c0_7, %c0_8] : memref<1x1x128xf32, #tpu.memory_space<vmem>>, vector<1x1x128xf32>
    %9 = vector.shape_cast %8 : vector<1x1x128xf32> to vector<1x128xf32>
    %10 = tpu.transpose %9, [1, 0] : vector<1x128xf32> -> vector<128x1xf32>
    %cst_9 = arith.constant 5.000000e-01 : f32
    %11 = vector.broadcast %cst_9 : f32 to vector<128x1xf32>
    %12 = arith.cmpf olt, %10, %11 : vector<128x1xf32>
    %c0_10 = arith.constant 0 : index
    %c0_11 = arith.constant 0 : index
    %13 = vector.load %arg5[%c0_10, %c0_11] : memref<1x32xf32, #tpu.memory_space<vmem>>, vector<1x32xf32>
    %14 = vector.shape_cast %12 : vector<128x1xi1> to vector<128x1xi1>
    %15 = vector.broadcast %14 : vector<128x1xi1> to vector<128x32xi1>
    %16 = vector.shape_cast %13 : vector<1x32xf32> to vector<1x32xf32>
    %17 = vector.broadcast %16 : vector<1x32xf32> to vector<128x32xf32>
    %18 = arith.select %15, %17, %7 : vector<128x32xi1>, vector<128x32xf32>
    %c0_12 = arith.constant 0 : index
    %c0_13 = arith.constant 0 : index
    %c0_14 = arith.constant 0 : index
    %19 = vector.load %arg7[%c0_12, %c0_13, %c0_14] : memref<1x128x32xf32, #tpu.memory_space<vmem>>, vector<1x128x32xf32>
    %20 = vector.shape_cast %19 : vector<1x128x32xf32> to vector<128x32xf32>
    %21 = vector.shape_cast %18 : vector<128x32xf32> to vector<1x128x32xf32>
    tpu.vector_store %arg7[%c0_12, %c0_13, %c0_14], %21 {strides = array<i32>} : memref<1x128x32xf32, #tpu.memory_space<vmem>>, vector<1x128x32xf32>,
    return
  }
  func.func @transform_0(%arg0: i32, %arg1: i32) -> (i32, i32, i32) {
    %c0_i32 = arith.constant 0 : i32
    %c0_i32_0 = arith.constant 0 : i32
    return %arg0, %c0_i32, %arg1 : i32, i32, i32
  }
  func.func @transform_1(%arg0: i32, %arg1: i32) -> (i32, i32) {
    %c0_i32 = arith.constant 0 : i32
    %c0_i32_0 = arith.constant 0 : i32
    %c0_i32_1 = arith.constant 0 : i32
    return %c0_i32, %c0_i32_0 : i32, i32
  }
  func.func @transform_2(%arg0: i32, %arg1: i32) -> (i32, i32) {
    %c0_i32 = arith.constant 0 : i32
    %c0_i32_0 = arith.constant 0 : i32
    %c0_i32_1 = arith.constant 0 : i32
    return %c0_i32, %c0_i32_0 : i32, i32
  }
  func.func @transform_3(%arg0: i32, %arg1: i32) -> (i32, i32) {
    %c0_i32 = arith.constant 0 : i32
    %c0_i32_0 = arith.constant 0 : i32
    %c0_i32_1 = arith.constant 0 : i32
    return %c0_i32, %c0_i32_0 : i32, i32
  }
  func.func @transform_4(%arg0: i32, %arg1: i32) -> (i32, i32, i32) {
    %c0_i32 = arith.constant 0 : i32
    %c0_i32_0 = arith.constant 0 : i32
    return %arg0, %c0_i32, %arg1 : i32, i32, i32
  }
  func.func @transform_5(%arg0: i32, %arg1: i32) -> (i32, i32, i32) {
    %c0_i32 = arith.constant 0 : i32
    %c0_i32_0 = arith.constant 0 : i32
    return %arg0, %arg1, %c0_i32 : i32, i32, i32
  }
}

</mosaic_0001>

<llo_original>
// kernel: ctc_decoder_forward.1
$region0: #{ctc_decoder_forward.1}
  #allocation0 [shape = 'u32[]', space=smem, size = 0x4, offset = 0x4, fixed_abs, tag = 'smem constant byte address 0x4 - core index']
  #allocation1 [shape = 'u32[72,128]{1,0:T(1,128)}', space=vmem, size = 0x9000, scoped, tag = 'internal scratch']
  %s0 = inlined_call_operand.hbm [shape: f32[2,128,128], index: 0, kind: input, shape index: {}]
  %s1 = inlined_call_operand.vmem [shape: bf16[128,32], index: 1, kind: input, shape index: {}]
  %s2 = inlined_call_operand.vmem [shape: f32[1,32], index: 2, kind: input, shape index: {}]
  %s3 = inlined_call_operand.vmem [shape: f32[1,32], index: 3, kind: input, shape index: {}]
  %s4 = inlined_call_operand.vmem [shape: f32[2,1,128], index: 4, kind: input, shape index: {}]
  %s5 = inlined_call_operand.vmem [shape: f32[2,128,32], index: 5, kind: output, shape index: {}]
  %s6 = sld [smem:[#allocation0]]
  $region57: #{ctc_decoder_forward.1} parent=0
    _
  %s8 = ssub.s32 1, %s6
  %s9 = scalar_select 0, %s8, %s6
  $region1: #{ctc_decoder_forward.1} parent=0
    #allocation2 [shape = 'u8[131072]{0}', space=vmem, size = 0x20000, scoped, tag = 'input window, operand 0']
    #allocation3 [shape = 's32[2]{0}', space=sflag, size = 0x8, scoped, tag = 'scoped memory for ctc_decoder_forward.1']
    %10 = vsyncpa [#allocation3], 0
    %s11 = scalar_lea.sflag [#allocation3], 1
    %12 = vsyncpa %s11, 0
    loop: start=0, step=1, limit=4
    $region2: #{ctc_decoder_forward.1} parent=1 // loop_pre_header
      _
    $region3: #{ctc_decoder_forward.1} parent=1 // loop_header
      %s14 = sphi 0, %s18
      %p15 = scmp.ge.s32.totalorder %s14, 4
      %s21 = sphi 0, %s33
      %s22 = sphi 0, %s29
      %s23 = sphi 0, %s21
      %s24 = sphi 0, %s22
      %s25 = sphi 0, %s23
      %s26 = sphi 0, %s24
      %s38 = sphi 0, %s40
      %s41 = sphi 0, %s38
      %s42 = sphi 0, %s41
      %s58 = sphi 0, %s42
      %s62 = sphi 0, %s62
      %s64 = sphi 0, %s62
      %s65 = sphi 0, %s64
      %s79 = sphi 0, %s65
      %s83 = sphi 0, %s83
      %s85 = sphi 0, %s83
      %s86 = sphi 0, %s85
      %s100 = sphi 0, %s86
      %s104 = sphi 0, %s104
      %s106 = sphi 0, %s104
      %s107 = sphi 0, %s106
      %s121 = sphi 0, %s107
      %s129 = sphi 0, %s131
      %s132 = sphi 0, %s129
      %s133 = sphi 0, %s132
      %s149 = sphi 0, %s133
      %s157 = sphi 0, %s159
      %s160 = sphi 0, %s157
      %s161 = sphi 0, %s160
      %s177 = sphi 0, %s161
    $region4: #{ctc_decoder_forward.1} parent=1 // loop_header_branch
      %17 = sbr.rel (%p15) target = $region8
    $region5: #{ctc_decoder_forward.1} parent=1 // loop_body
      %s19 = ssub.s32 %s14, 1
      %s20 = ssub.s32 %s14, 2
      %s27 = sadd.s32 1, %s22
      %p28 = scmp.ge.s32.totalorder %s27, 1
      %s29 = scalar_select %p28, 0, %s27
      %s30 = sadd.s32 1, %s21
      %s31 = scalar_select %p28, %s30, %s21
      %p32 = scmp.ge.s32.totalorder %s31, 2
      %s33 = scalar_select %p32, 0, %s31
      %s34 = ssub.s32 %s21, %s33
      %s35 = ssub.s32 %s22, %s29
      %s36 = sor.u32 %s34, %s35
      %p37 = scmp.eq.s32.totalorder %s36, 0
      %s39 = sadd.s32 %s38, 1
      %s40 = scalar_select %p37, %s38, %s39
      %p43 = pneg %p37
      %p44 = scmp.eq.s32.totalorder %s14, 1
      %p45 = por %p43, %p44
      %p46 = scmp.ne.s32.totalorder %s38, %s41
      %p47 = scmp.eq.s32.totalorder %s14, 0
      %p48 = por %p46, %p47
      %p49 = scmp.ne.s32.totalorder %s38, %s41
      %p50 = scmp.eq.s32.totalorder %s19, 1
      %p51 = por %p49, %p50
      %p52 = scmp.ne.s32.totalorder %s41, %s42
      %p53 = scmp.eq.s32.totalorder %s19, 0
      %p54 = por %p52, %p53
      %p55 = scmp.ne.s32.totalorder %s41, %s42
      %p56 = scmp.eq.s32.totalorder %s20, 1
      %p57 = por %p55, %p56
      %p59 = scmp.ne.s32.totalorder %s42, %s58
      %p60 = scmp.eq.s32.totalorder %s20, 0
      %p61 = por %p59, %p60
      %s63 = sadd.s32 %s62, 1
      %p66 = scmp.eq.s32.totalorder %s14, 1
      %p67 = scmp.ne.s32.totalorder %s62, %s64
      %p68 = scmp.eq.s32.totalorder %s14, 0
      %p69 = por %p67, %p68
      %p70 = scmp.ne.s32.totalorder %s62, %s64
      %p71 = scmp.eq.s32.totalorder %s19, 1
      %p72 = por %p70, %p71
      %p73 = scmp.ne.s32.totalorder %s64, %s65
      %p74 = scmp.eq.s32.totalorder %s19, 0
      %p75 = por %p73, %p74
      %p76 = scmp.ne.s32.totalorder %s64, %s65
      %p77 = scmp.eq.s32.totalorder %s20, 1
      %p78 = por %p76, %p77
      %p80 = scmp.ne.s32.totalorder %s65, %s79
      %p81 = scmp.eq.s32.totalorder %s20, 0
      %p82 = por %p80, %p81
      %s84 = sadd.s32 %s83, 1
      %p87 = scmp.eq.s32.totalorder %s14, 1
      %p88 = scmp.ne.s32.totalorder %s83, %s85
      %p89 = scmp.eq.s32.totalorder %s14, 0
      %p90 = por %p88, %p89
      %p91 = scmp.ne.s32.totalorder %s83, %s85
      %p92 = scmp.eq.s32.totalorder %s19, 1
      %p93 = por %p91, %p92
      %p94 = scmp.ne.s32.totalorder %s85, %s86
      %p95 = scmp.eq.s32.totalorder %s19, 0
      %p96 = por %p94, %p95
      %p97 = scmp.ne.s32.totalorder %s85, %s86
      %p98 = scmp.eq.s32.totalorder %s20, 1
      %p99 = por %p97, %p98
      %p101 = scmp.ne.s32.totalorder %s86, %s100
      %p102 = scmp.eq.s32.totalorder %s20, 0
      %p103 = por %p101, %p102
      %s105 = sadd.s32 %s104, 1
      %p108 = scmp.eq.s32.totalorder %s14, 1
      %p109 = scmp.ne.s32.totalorder %s104, %s106
      %p110 = scmp.eq.s32.totalorder %s14, 0
      %p111 = por %p109, %p110
      %p112 = scmp.ne.s32.totalorder %s104, %s106
      %p113 = scmp.eq.s32.totalorder %s19, 1
      %p114 = por %p112, %p113
      %p115 = scmp.ne.s32.totalorder %s106, %s107
      %p116 = scmp.eq.s32.totalorder %s19, 0
      %p117 = por %p115, %p116
      %p118 = scmp.ne.s32.totalorder %s106, %s107
      %p119 = scmp.eq.s32.totalorder %s20, 1
      %p120 = por %p118, %p119
      %p122 = scmp.ne.s32.totalorder %s107, %s121
      %p123 = scmp.eq.s32.totalorder %s20, 0
      %p124 = por %p122, %p123
      %s125 = ssub.s32 %s21, %s33
      %s126 = ssub.s32 %s22, %s29
      %s127 = sor.u32 %s125, %s126
      %p128 = scmp.eq.s32.totalorder %s127, 0
      %s130 = sadd.s32 %s129, 1
      %s131 = scalar_select %p128, %s129, %s130
      %p134 = pneg %p128
      %p135 = scmp.eq.s32.totalorder %s14, 1
      %p136 = por %p134, %p135
      %p137 = scmp.ne.s32.totalorder %s129, %s132
      %p138 = scmp.eq.s32.totalorder %s14, 0
      %p139 = por %p137, %p138
      %p140 = scmp.ne.s32.totalorder %s129, %s132
      %p141 = scmp.eq.s32.totalorder %s19, 1
      %p142 = por %p140, %p141
      %p143 = scmp.ne.s32.totalorder %s132, %s133
      %p144 = scmp.eq.s32.totalorder %s19, 0
      %p145 = por %p143, %p144
      %p146 = scmp.ne.s32.totalorder %s132, %s133
      %p147 = scmp.eq.s32.totalorder %s20, 1
      %p148 = por %p146, %p147
      %p150 = scmp.ne.s32.totalorder %s133, %s149
      %p151 = scmp.eq.s32.totalorder %s20, 0
      %p152 = por %p150, %p151
      %s153 = ssub.s32 %s21, %s33
      %s154 = ssub.s32 %s22, %s29
      %s155 = sor.u32 %s153, %s154
      %p156 = scmp.eq.s32.totalorder %s155, 0
      %s158 = sadd.s32 %s157, 1
      %s159 = scalar_select %p156, %s157, %s158
      %p162 = pneg %p156
      %p163 = scmp.eq.s32.totalorder %s14, 1
      %p164 = por %p162, %p163
      %p165 = scmp.ne.s32.totalorder %s157, %s160
      %p166 = scmp.eq.s32.totalorder %s14, 0
      %p167 = por %p165, %p166
      %p168 = scmp.ne.s32.totalorder %s157, %s160
      %p169 = scmp.eq.s32.totalorder %s19, 1
      %p170 = por %p168, %p169
      %p171 = scmp.ne.s32.totalorder %s160, %s161
      %p172 = scmp.eq.s32.totalorder %s19, 0
      %p173 = por %p171, %p172
      %p174 = scmp.ne.s32.totalorder %s160, %s161
      %p175 = scmp.eq.s32.totalorder %s20, 1
      %p176 = por %p174, %p175
      %p178 = scmp.ne.s32.totalorder %s161, %s177
      %p179 = scmp.eq.s32.totalorder %s20, 0
      %p180 = por %p178, %p179
      %p181 = scmp.le.s32.totalorder 1, %s14
      %p182 = scmp.lt.s32.totalorder %s14, 3
      %p183 = pnand %p181, %p182
      %p184 = pneg %p183
      // Predicated region
      $region9: #{ctc_decoder_forward.1} parent=5 // pred_check
        _
      $region10: #{ctc_decoder_forward.1} parent=5 // pred_check_branch
        %186 = sbr.rel (%p183) target = $region12
      $region11: #{ctc_decoder_forward.1} parent=5 // pred_region
        %s187 = ssub.s32 %s14, 1
        // Predicated region
        $region13: #{ctc_decoder_forward.1} parent=11 // pred_check
          %p188 = pneg %p75
        $region14: #{ctc_decoder_forward.1} parent=11 // pred_check_branch
          %190 = sbr.rel (%p188) target = $region16
        $region15: #{ctc_decoder_forward.1} parent=11 // pred_region
          _
        $region16: #{ctc_decoder_forward.1} parent=11 // pred_fallthru
          _
        // Predicated region
        $region17: #{ctc_decoder_forward.1} parent=11 // pred_check
          %p191 = pneg %p96
        $region18: #{ctc_decoder_forward.1} parent=11 // pred_check_branch
          %193 = sbr.rel (%p191) target = $region20
        $region19: #{ctc_decoder_forward.1} parent=11 // pred_region
          _
        $region20: #{ctc_decoder_forward.1} parent=11 // pred_fallthru
          _
        // Predicated region
        $region21: #{ctc_decoder_forward.1} parent=11 // pred_check
          %p194 = pneg %p117
        $region22: #{ctc_decoder_forward.1} parent=11 // pred_check_branch
          %196 = sbr.rel (%p194) target = $region24
        $region23: #{ctc_decoder_forward.1} parent=11 // pred_region
          _
        $region24: #{ctc_decoder_forward.1} parent=11 // pred_fallthru
          _
      $region12: #{ctc_decoder_forward.1} parent=5 // pred_fallthru
        _
      %p197 = scmp.lt.s32.totalorder %s14, 2
      // Predicated region
      $region25: #{ctc_decoder_forward.1} parent=5 // pred_check
        %p198 = pneg %p197
      $region26: #{ctc_decoder_forward.1} parent=5 // pred_check_branch
        %200 = sbr.rel (%p198) target = $region28
      $region27: #{ctc_decoder_forward.1} parent=5 // pred_region
        // Predicated region
        $region29: #{ctc_decoder_forward.1} parent=27 // pred_check
          %p201 = pneg %p48
        $region30: #{ctc_decoder_forward.1} parent=27 // pred_check_branch
          %203 = sbr.rel (%p201) target = $region32
        $region31: #{ctc_decoder_forward.1} parent=27 // pred_region
          %s204 = sand.u32 %s38, 1
          %s205 = scalar_lea.sflag [#allocation3], %s204
          %s206 = sand.u32 %s38, 1
          %s207 = smul.addr %s206, 128
          %s208 = scalar_lea.vmem [#allocation2], %s207
          %210 = vsyncadd %s205, 0
          %s211 = smul.addr %s21, 16
          %s212 = sadd.s32 %s22, %s211
          %s213 = smul.addr %s212, 8
          %s214 = scalar_lea.hbm %s0, %s213
          %s215 = sshll.u32 %s214, 4
          %s216 = int_to_ptr.hbm [resolvable:$true] %s215
          %s217 = sshll.u32 %s208, 4
          %s218 = int_to_ptr.vmem [resolvable:$true] %s217
          %223 = dma.hbm_to_vmem [thread:$0]  %s216, 2048, %s218, %s205, 128, 128, 8
        $region32: #{ctc_decoder_forward.1} parent=27 // pred_fallthru
          _
        // Predicated region
        $region33: #{ctc_decoder_forward.1} parent=27 // pred_check
          %p224 = pneg %p139
        $region34: #{ctc_decoder_forward.1} parent=27 // pred_check_branch
          %226 = sbr.rel (%p224) target = $region36
        $region35: #{ctc_decoder_forward.1} parent=27 // pred_region
          %p227 = scmp.lt.s32.totalorder %s21, 1
          %s228 = scalar_select %p227, %s21, 1
          %p229 = scmp.lt.s32.totalorder %s22, 0
          %s230 = scalar_select %p229, %s22, 0
          %s231 = sadd.s32 %s230, %s228
          %s232 = scalar_lea.vmem %s4, %s231
        $region36: #{ctc_decoder_forward.1} parent=27 // pred_fallthru
          _
      $region28: #{ctc_decoder_forward.1} parent=5 // pred_fallthru
        _
      %p233 = scmp.le.s32.totalorder 1, %s14
      %p234 = scmp.lt.s32.totalorder %s14, 3
      %p235 = pnand %p233, %p234
      %p236 = pneg %p235
      // Predicated region
      $region37: #{ctc_decoder_forward.1} parent=5 // pred_check
        _
      $region38: #{ctc_decoder_forward.1} parent=5 // pred_check_branch
        %238 = sbr.rel (%p235) target = $region40
      $region39: #{ctc_decoder_forward.1} parent=5 // pred_region
        %s239 = ssub.s32 %s14, 1
        %s240 = sand.u32 %s41, 1
        %s241 = scalar_lea.sflag [#allocation3], %s240
        %s242 = sand.u32 %s41, 1
        %s243 = smul.addr %s242, 128
        %s244 = scalar_lea.vmem [#allocation2], %s243
        // Predicated region
        $region41: #{ctc_decoder_forward.1} parent=39 // pred_check
          %p245 = pneg %p54
        $region42: #{ctc_decoder_forward.1} parent=39 // pred_check_branch
          %247 = sbr.rel (%p245) target = $region44
        $region43: #{ctc_decoder_forward.1} parent=39 // pred_region
          %249 = dma.done %s241, 2048
        $region44: #{ctc_decoder_forward.1} parent=39 // pred_fallthru
          _
        %s250 = sand.u32 %s41, 1
        %s251 = scalar_lea.sflag [#allocation3], %s250
        %s252 = sand.u32 %s41, 1
        %s253 = smul.addr %s252, 128
        %s254 = scalar_lea.vmem [#allocation2], %s253
        %p255 = pneg %p54
        %p256 = pneg %p51
        %p257 = pneg %p75
        %p258 = pneg %p72
        %p259 = pneg %p96
        %p260 = pneg %p93
        %p261 = pneg %p117
        %p262 = pneg %p114
        %p263 = scmp.lt.s32.totalorder %s23, 1
        %s264 = scalar_select %p263, %s23, 1
        %p265 = scmp.lt.s32.totalorder %s24, 0
        %s266 = scalar_select %p265, %s24, 0
        %s267 = sadd.s32 %s266, %s264
        %s268 = scalar_lea.vmem %s4, %s267
        %p269 = pneg %p145
        %p270 = pneg %p142
        %p271 = pneg %p173
        %p272 = pneg %p170
        %s273 = smul.u32 16, %s24
        %p274 = scmp.lt.s32.totalorder %s23, 1
        %s275 = scalar_select %p274, %s23, 1
        %p276 = scmp.lt.s32.totalorder %s273, 15
        %s277 = scalar_select %p276, %s273, 15
        %s278 = smul.addr %s275, 16
        %s279 = sadd.s32 %s277, %s278
        %s280 = smul.addr %s279, 8
        %s281 = scalar_lea.vmem %s5, %s280
        %p282 = scmp.lt.s32.totalorder %s23, 1
        %s283 = scalar_select %p282, %s23, 1
        %p284 = scmp.lt.s32.totalorder %s24, 0
        %s285 = scalar_select %p284, %s24, 0
        %s286 = sadd.s32 %s285, %s283
        %s287 = scalar_lea.vmem %s4, %s286
        %s288 = smul.u32 16, %s24
        %p289 = scmp.lt.s32.totalorder %s23, 1
        %s290 = scalar_select %p289, %s23, 1
        %p291 = scmp.lt.s32.totalorder %s288, 15
        %s292 = scalar_select %p291, %s288, 15
        %s293 = smul.addr %s290, 16
        %s294 = sadd.s32 %s292, %s293
        %s295 = smul.addr %s294, 8
        %s296 = scalar_lea.vmem %s5, %s295
        %s297 = smul.u32 16, %s24
        %v298 = vld [vmem:[%s244] sm:$0xff]
        %v299 = vld [vmem:[%s244 + $0x8] sm:$0xff]
        %v300 = vld [vmem:[%s244 + $0x10] sm:$0xff]
        %v301 = vld [vmem:[%s244 + $0x18] sm:$0xff]
        %v302 = vld [vmem:[%s244 + $0x20] sm:$0xff]
        %v303 = vld [vmem:[%s244 + $0x28] sm:$0xff]
        %v304 = vld [vmem:[%s244 + $0x30] sm:$0xff]
        %v305 = vld [vmem:[%s244 + $0x38] sm:$0xff]
        %v306 = vld [vmem:[%s244 + $0x40] sm:$0xff]
        %v307 = vld [vmem:[%s244 + $0x48] sm:$0xff]
        %v308 = vld [vmem:[%s244 + $0x50] sm:$0xff]
        %v309 = vld [vmem:[%s244 + $0x58] sm:$0xff]
        %v310 = vld [vmem:[%s244 + $0x60] sm:$0xff]
        %v311 = vld [vmem:[%s244 + $0x68] sm:$0xff]
        %v312 = vld [vmem:[%s244 + $0x70] sm:$0xff]
        %v313 = vld [vmem:[%s244 + $0x78] sm:$0xff]
        %v314 = vpack.c.bf16 %v299, %v298
        %v315 = vpack.c.bf16 %v301, %v300
        %v316 = vpack.c.bf16 %v303, %v302
        %v317 = vpack.c.bf16 %v305, %v304
        %v318 = vpack.c.bf16 %v307, %v306
        %v319 = vpack.c.bf16 %v309, %v308
        %v320 = vpack.c.bf16 %v311, %v310
        %v321 = vpack.c.bf16 %v313, %v312
        %v322 = vld [vmem:[%s1] sm:$0xf]
        %v323 = vld [vmem:[%s1 + $0x4] sm:$0xf]
        %v324 = vld [vmem:[%s1 + $0x8] sm:$0xf]
        %v325 = vld [vmem:[%s1 + $0xc] sm:$0xf]
        %v326 = vld [vmem:[%s1 + $0x10] sm:$0xf]
        %v327 = vld [vmem:[%s1 + $0x14] sm:$0xf]
        %v328 = vld [vmem:[%s1 + $0x18] sm:$0xf]
        %v329 = vld [vmem:[%s1 + $0x1c] sm:$0xf]
        %v330 = vld [vmem:[%s1 + $0x20] sm:$0xf]
        %v331 = vld [vmem:[%s1 + $0x24] sm:$0xf]
        %v332 = vld [vmem:[%s1 + $0x28] sm:$0xf]
        %v333 = vld [vmem:[%s1 + $0x2c] sm:$0xf]
        %v334 = vld [vmem:[%s1 + $0x30] sm:$0xf]
        %v335 = vld [vmem:[%s1 + $0x34] sm:$0xf]
        %v336 = vld [vmem:[%s1 + $0x38] sm:$0xf]
        %v337 = vld [vmem:[%s1 + $0x3c] sm:$0xf]
        %v338 = vld [vmem:[%s2] sm:$0x1]
        %v340 = vperm.slane %v338, 0
        %342 = vxpose.xlu0.c.b16.start [1/8] %v314, 128
        %343 = vxpose.xlu0.c.b16.cont [2/8] %v315, 128
        %344 = vxpose.xlu0.c.b16.cont [3/8] %v316, 128
        %345 = vxpose.xlu0.c.b16.cont [4/8] %v317, 128
        %346 = vxpose.xlu0.c.b16.cont [5/8] %v318, 128
        %347 = vxpose.xlu0.c.b16.cont [6/8] %v319, 128
        %348 = vxpose.xlu0.c.b16.cont [7/8] %v320, 128
        %349 = vxpose.xlu0.c.b16.end [8/8] %v321, 128
        %v350 = vpop.trf.xlu0
        %v351 = vpop.trf.xlu0
        %v352 = vpop.trf.xlu0
        %v353 = vpop.trf.xlu0
        %v354 = vpop.trf.xlu0
        %v355 = vpop.trf.xlu0
        %v356 = vpop.trf.xlu0
        %v357 = vpop.trf.xlu0
        %v374 = vunpack.c.l.b16 %v322
        %v375 = vunpack.c.l.b16 %v323
        %v376 = vunpack.c.l.b16 %v324
        %v377 = vunpack.c.l.b16 %v325
        %v378 = vunpack.c.l.b16 %v326
        %v379 = vunpack.c.l.b16 %v327
        %v380 = vunpack.c.l.b16 %v328
        %v381 = vunpack.c.l.b16 %v329
        %v382 = vunpack.c.l.b16 %v330
        %v383 = vunpack.c.l.b16 %v331
        %v384 = vunpack.c.l.b16 %v332
        %v385 = vunpack.c.l.b16 %v333
        %v386 = vunpack.c.l.b16 %v334
        %v387 = vunpack.c.l.b16 %v335
        %v388 = vunpack.c.l.b16 %v336
        %v389 = vunpack.c.l.b16 %v337
        %v390 = vpack.c.b16 %v375, %v374
        %v391 = vpack.c.b16 %v377, %v376
        %v392 = vpack.c.b16 %v379, %v378
        %v393 = vpack.c.b16 %v381, %v380
        %v394 = vpack.c.b16 %v383, %v382
        %v395 = vpack.c.b16 %v385, %v384
        %v396 = vpack.c.b16 %v387, %v386
        %v397 = vpack.c.b16 %v389, %v388
        %406 = vmatpush.bf16.msra.mxu0 %v397
        %407 = vmatpush.bf16.msra.mxu0 %v396
        %408 = vmatpush.bf16.msra.mxu0 %v395
        %409 = vmatpush.bf16.msra.mxu0 %v394
        %410 = vmatpush.bf16.msra.mxu0 %v393
        %411 = vmatpush.bf16.msra.mxu0 %v392
        %412 = vmatpush.bf16.msra.mxu0 %v391
        %413 = vmatpush.bf16.msra.mxu0 %v390
        %414 = vmatmul.bf16.gmra.mxu0 %v350
        %v415 = vpop.f32.mrf.mxu0
        %v416 = vadd.f32 %v340, %v415
        %v417 = vpop.f32.mrf.mxu0
        %v418 = vadd.f32 %v340, %v417
        %419 = vmatmul.bf16.gmra.mxu0 %v351
        %v420 = vpop.f32.mrf.mxu0
        %v421 = vadd.f32 %v340, %v420
        %v422 = vpop.f32.mrf.mxu0
        %v423 = vadd.f32 %v340, %v422
        %424 = vmatmul.bf16.gmra.mxu0 %v352
        %v425 = vpop.f32.mrf.mxu0
        %v426 = vadd.f32 %v340, %v425
        %v427 = vpop.f32.mrf.mxu0
        %v428 = vadd.f32 %v340, %v427
        %429 = vmatmul.bf16.gmra.mxu0 %v353
        %v430 = vpop.f32.mrf.mxu0
        %v431 = vadd.f32 %v340, %v430
        %v432 = vpop.f32.mrf.mxu0
        %v433 = vadd.f32 %v340, %v432
        %434 = vmatmul.bf16.gmra.mxu0 %v354
        %v435 = vpop.f32.mrf.mxu0
        %v436 = vadd.f32 %v340, %v435
        %v437 = vpop.f32.mrf.mxu0
        %v438 = vadd.f32 %v340, %v437
        %439 = vmatmul.bf16.gmra.mxu0 %v355
        %v440 = vpop.f32.mrf.mxu0
        %v441 = vadd.f32 %v340, %v440
        %v442 = vpop.f32.mrf.mxu0
        %v443 = vadd.f32 %v340, %v442
        %444 = vmatmul.bf16.gmra.mxu0 %v356
        %v445 = vpop.f32.mrf.mxu0
        %v446 = vadd.f32 %v340, %v445
        %v447 = vpop.f32.mrf.mxu0
        %v448 = vadd.f32 %v340, %v447
        %449 = vmatmul.bf16.gmra.mxu0 %v357
        %v450 = vpop.f32.mrf.mxu0
        %v451 = vadd.f32 %v340, %v450
        %v452 = vpop.f32.mrf.mxu0
        %v453 = vadd.f32 %v340, %v452
        %454 = vdwg.mxu0
        %v455 = vld [vmem:[%s287] sm:$0x1]
        %456 = vxpose.xlu0.b32.start [1/16] %v455, 128
        %457 = vxpose.xlu0.b32.cont [2/16] 0.0, 128
        %458 = vxpose.xlu0.b32.cont [3/16] 0.0, 128
        %459 = vxpose.xlu0.b32.cont [4/16] 0.0, 128
        %460 = vxpose.xlu0.b32.cont [5/16] 0.0, 128
        %461 = vxpose.xlu0.b32.cont [6/16] 0.0, 128
        %462 = vxpose.xlu0.b32.cont [7/16] 0.0, 128
        %463 = vxpose.xlu0.b32.cont [8/16] 0.0, 128
        %464 = vxpose.xlu0.b32.cont [9/16] 0.0, 128
        %465 = vxpose.xlu0.b32.cont [10/16] 0.0, 128
        %466 = vxpose.xlu0.b32.cont [11/16] 0.0, 128
        %467 = vxpose.xlu0.b32.cont [12/16] 0.0, 128
        %468 = vxpose.xlu0.b32.cont [13/16] 0.0, 128
        %469 = vxpose.xlu0.b32.cont [14/16] 0.0, 128
        %470 = vxpose.xlu0.b32.cont [15/16] 0.0, 128
        %471 = vxpose.xlu0.b32.end [16/16] 0.0, 128
        %v472 = vpop.trf.xlu0
        %v473 = vpop.trf.xlu0
        %v474 = vpop.trf.xlu0
        %v475 = vpop.trf.xlu0
        %v476 = vpop.trf.xlu0
        %v477 = vpop.trf.xlu0
        %v478 = vpop.trf.xlu0
        %v479 = vpop.trf.xlu0
        %v480 = vpop.trf.xlu0
        %v481 = vpop.trf.xlu0
        %v482 = vpop.trf.xlu0
        %v483 = vpop.trf.xlu0
        %v484 = vpop.trf.xlu0
        %v485 = vpop.trf.xlu0
        %v486 = vpop.trf.xlu0
        %v487 = vpop.trf.xlu0
        %vm488 = vcmp.lt.f32.partialorder %v472, 0.5
        %vm489 = vcmp.lt.f32.partialorder %v473, 0.5
        %vm490 = vcmp.lt.f32.partialorder %v474, 0.5
        %vm491 = vcmp.lt.f32.partialorder %v475, 0.5
        %vm492 = vcmp.lt.f32.partialorder %v476, 0.5
        %vm493 = vcmp.lt.f32.partialorder %v477, 0.5
        %vm494 = vcmp.lt.f32.partialorder %v478, 0.5
        %vm495 = vcmp.lt.f32.partialorder %v479, 0.5
        %vm496 = vcmp.lt.f32.partialorder %v480, 0.5
        %vm497 = vcmp.lt.f32.partialorder %v481, 0.5
        %vm498 = vcmp.lt.f32.partialorder %v482, 0.5
        %vm499 = vcmp.lt.f32.partialorder %v483, 0.5
        %vm500 = vcmp.lt.f32.partialorder %v484, 0.5
        %vm501 = vcmp.lt.f32.partialorder %v485, 0.5
        %vm502 = vcmp.lt.f32.partialorder %v486, 0.5
        %vm503 = vcmp.lt.f32.partialorder %v487, 0.5
        %v504 = vld [vmem:[%s3] sm:$0x1]
        %v505 = vsel %vm488, 1, 0
        %v506 = vsel %vm489, 1, 0
        %v507 = vsel %vm490, 1, 0
        %v508 = vsel %vm491, 1, 0
        %v509 = vsel %vm492, 1, 0
        %v510 = vsel %vm493, 1, 0
        %v511 = vsel %vm494, 1, 0
        %v512 = vsel %vm495, 1, 0
        %v513 = vsel %vm496, 1, 0
        %v514 = vsel %vm497, 1, 0
        %v515 = vsel %vm498, 1, 0
        %v516 = vsel %vm499, 1, 0
        %v517 = vsel %vm500, 1, 0
        %v518 = vsel %vm501, 1, 0
        %v519 = vsel %vm502, 1, 0
        %v520 = vsel %vm503, 1, 0
        %521 = vset.pattern.permute.xlu0 0
        %522 = vperm.xlu0 %521, %v505
        %v523 = vpop.permute.xlu0 %522
        %524 = vset.pattern.permute.xlu0 0
        %525 = vperm.xlu0 %524, %v506
        %v526 = vpop.permute.xlu0 %525
        %527 = vset.pattern.permute.xlu0 0
        %528 = vperm.xlu0 %527, %v507
        %v529 = vpop.permute.xlu0 %528
        %530 = vset.pattern.permute.xlu0 0
        %531 = vperm.xlu0 %530, %v508
        %v532 = vpop.permute.xlu0 %531
        %533 = vset.pattern.permute.xlu0 0
        %534 = vperm.xlu0 %533, %v509
        %v535 = vpop.permute.xlu0 %534
        %536 = vset.pattern.permute.xlu0 0
        %537 = vperm.xlu0 %536, %v510
        %v538 = vpop.permute.xlu0 %537
        %539 = vset.pattern.permute.xlu0 0
        %540 = vperm.xlu0 %539, %v511
        %v541 = vpop.permute.xlu0 %540
        %542 = vset.pattern.permute.xlu0 0
        %543 = vperm.xlu0 %542, %v512
        %v544 = vpop.permute.xlu0 %543
        %545 = vset.pattern.permute.xlu0 0
        %546 = vperm.xlu0 %545, %v513
        %v547 = vpop.permute.xlu0 %546
        %548 = vset.pattern.permute.xlu0 0
        %549 = vperm.xlu0 %548, %v514
        %v550 = vpop.permute.xlu0 %549
        %551 = vset.pattern.permute.xlu0 0
        %552 = vperm.xlu0 %551, %v515
        %v553 = vpop.permute.xlu0 %552
        %554 = vset.pattern.permute.xlu0 0
        %555 = vperm.xlu0 %554, %v516
        %v556 = vpop.permute.xlu0 %555
        %557 = vset.pattern.permute.xlu0 0
        %558 = vperm.xlu0 %557, %v517
        %v559 = vpop.permute.xlu0 %558
        %560 = vset.pattern.permute.xlu0 0
        %561 = vperm.xlu0 %560, %v518
        %v562 = vpop.permute.xlu0 %561
        %563 = vset.pattern.permute.xlu0 0
        %564 = vperm.xlu0 %563, %v519
        %v565 = vpop.permute.xlu0 %564
        %566 = vset.pattern.permute.xlu0 0
        %567 = vperm.xlu0 %566, %v520
        %v568 = vpop.permute.xlu0 %567
        %vm569 = vcmp.eq.s32.totalorder %v523, 1
        %vm570 = vcmp.eq.s32.totalorder %v526, 1
        %vm571 = vcmp.eq.s32.totalorder %v529, 1
        %vm572 = vcmp.eq.s32.totalorder %v532, 1
        %vm573 = vcmp.eq.s32.totalorder %v535, 1
        %vm574 = vcmp.eq.s32.totalorder %v538, 1
        %vm575 = vcmp.eq.s32.totalorder %v541, 1
        %vm576 = vcmp.eq.s32.totalorder %v544, 1
        %vm577 = vcmp.eq.s32.totalorder %v547, 1
        %vm578 = vcmp.eq.s32.totalorder %v550, 1
        %vm579 = vcmp.eq.s32.totalorder %v553, 1
        %vm580 = vcmp.eq.s32.totalorder %v556, 1
        %vm581 = vcmp.eq.s32.totalorder %v559, 1
        %vm582 = vcmp.eq.s32.totalorder %v562, 1
        %vm583 = vcmp.eq.s32.totalorder %v565, 1
        %vm584 = vcmp.eq.s32.totalorder %v568, 1
        %v586 = vperm.slane %v504, 0
        %v588 = vsel %vm569, %v586, %v416
        %v589 = vsel %vm570, %v586, %v418
        %v590 = vsel %vm571, %v586, %v421
        %v591 = vsel %vm572, %v586, %v423
        %v592 = vsel %vm573, %v586, %v426
        %v593 = vsel %vm574, %v586, %v428
        %v594 = vsel %vm575, %v586, %v431
        %v595 = vsel %vm576, %v586, %v433
        %v596 = vsel %vm577, %v586, %v436
        %v597 = vsel %vm578, %v586, %v438
        %v598 = vsel %vm579, %v586, %v441
        %v599 = vsel %vm580, %v586, %v443
        %v600 = vsel %vm581, %v586, %v446
        %v601 = vsel %vm582, %v586, %v448
        %v602 = vsel %vm583, %v586, %v451
        %v603 = vsel %vm584, %v586, %v453
        %vm604 = vcmask 261120
        %605 = vst.msk [vmem:[%s296] sm:$0xff] %vm604, %v588
        %606 = vst.msk [vmem:[%s296 + $0x8] sm:$0xff] %vm604, %v589
        %607 = vst.msk [vmem:[%s296 + $0x10] sm:$0xff] %vm604, %v590
        %608 = vst.msk [vmem:[%s296 + $0x18] sm:$0xff] %vm604, %v591
        %609 = vst.msk [vmem:[%s296 + $0x20] sm:$0xff] %vm604, %v592
        %610 = vst.msk [vmem:[%s296 + $0x28] sm:$0xff] %vm604, %v593
        %611 = vst.msk [vmem:[%s296 + $0x30] sm:$0xff] %vm604, %v594
        %612 = vst.msk [vmem:[%s296 + $0x38] sm:$0xff] %vm604, %v595
        %613 = vst.msk [vmem:[%s296 + $0x40] sm:$0xff] %vm604, %v596
        %614 = vst.msk [vmem:[%s296 + $0x48] sm:$0xff] %vm604, %v597
        %615 = vst.msk [vmem:[%s296 + $0x50] sm:$0xff] %vm604, %v598
        %616 = vst.msk [vmem:[%s296 + $0x58] sm:$0xff] %vm604, %v599
        %617 = vst.msk [vmem:[%s296 + $0x60] sm:$0xff] %vm604, %v600
        %618 = vst.msk [vmem:[%s296 + $0x68] sm:$0xff] %vm604, %v601
        %619 = vst.msk [vmem:[%s296 + $0x70] sm:$0xff] %vm604, %v602
        %620 = vst.msk [vmem:[%s296 + $0x78] sm:$0xff] %vm604, %v603
        %s621 = smul.u32 16, %s24
        %p622 = scmp.lt.s32.totalorder %s23, 1
        %s623 = scalar_select %p622, %s23, 1
        %p624 = scmp.lt.s32.totalorder %s621, 15
        %s625 = scalar_select %p624, %s621, 15
        %s626 = smul.addr %s623, 16
        %s627 = sadd.s32 %s625, %s626
        %s628 = smul.addr %s627, 8
        %s629 = scalar_lea.vmem %s5, %s628
        // Predicated region
        $region45: #{ctc_decoder_forward.1} parent=39 // pred_check
          %p630 = pneg %p170
        $region46: #{ctc_decoder_forward.1} parent=39 // pred_check_branch
          %632 = sbr.rel (%p630) target = $region48
        $region47: #{ctc_decoder_forward.1} parent=39 // pred_region
          %s633 = smul.u32 16, %s24
        $region48: #{ctc_decoder_forward.1} parent=39 // pred_fallthru
          _
      $region40: #{ctc_decoder_forward.1} parent=5 // pred_fallthru
        _
      %p634 = scmp.le.s32.totalorder 2, %s14
      // Predicated region
      $region49: #{ctc_decoder_forward.1} parent=5 // pred_check
        %p635 = pneg %p634
      $region50: #{ctc_decoder_forward.1} parent=5 // pred_check_branch
        %637 = sbr.rel (%p635) target = $region52
      $region51: #{ctc_decoder_forward.1} parent=5 // pred_region
        %s638 = ssub.s32 %s14, 2
        // Predicated region
        $region53: #{ctc_decoder_forward.1} parent=51 // pred_check
          %p639 = pneg %p176
        $region54: #{ctc_decoder_forward.1} parent=51 // pred_check_branch
          %641 = sbr.rel (%p639) target = $region56
        $region55: #{ctc_decoder_forward.1} parent=51 // pred_region
          %s642 = smul.u32 16, %s26
          %p643 = scmp.lt.s32.totalorder %s25, 1
          %s644 = scalar_select %p643, %s25, 1
          %p645 = scmp.lt.s32.totalorder %s642, 15
          %s646 = scalar_select %p645, %s642, 15
          %s647 = smul.addr %s644, 16
          %s648 = sadd.s32 %s646, %s647
          %s649 = smul.addr %s648, 8
          %s650 = scalar_lea.vmem %s5, %s649
        $region56: #{ctc_decoder_forward.1} parent=51 // pred_fallthru
          _
      $region52: #{ctc_decoder_forward.1} parent=5 // pred_fallthru
        _
    $region6: #{ctc_decoder_forward.1} parent=1 // loop_footer
      %s18 = sadd.s32 1, %s14
    $region7: #{ctc_decoder_forward.1} parent=1 // loop_footer_branch
      %13 = sbr.rel target = $region3
    $region8: #{ctc_decoder_forward.1} parent=1 // loop_exit
      _
    %651 = vsyncpa [#allocation3], 1
    %s652 = scalar_lea.sflag [#allocation3], 1
    %653 = vsyncpa %s652, 1

</llo_original>
